<compile_context>
chip_gen: v7x
topology: tpu7x:2x2x1
jax: 0.10.0
libtpu: 0.0.40
codegen_flags: <defaults>
</compile_context>

<pallas_src>
import functools

import jax
import jax.numpy as jnp
from jax.experimental import pallas as pl
from jax.experimental.pallas import tpu as pltpu


def _round_up(x: int, m: int) -> int:
    return ((x + m - 1) // m) * m


def qnetwork_kernel(x_ref,
                    w1_ref, b1_ref,
                    w2_ref, b2_ref,
                    w3_ref, b3_ref,
                    w4_ref, b4_ref,
                    o_ref):
    """Fused MLP forward for one batch tile: 4 matmuls + biases + 3 ReLUs."""
    x = x_ref[...]  # bf16, (TB, K_pad)

    h = jnp.dot(x, w1_ref[...], preferred_element_type=jnp.float32) + b1_ref[...]
    h = jnp.maximum(h, 0.0).astype(jnp.bfloat16)

    h = jnp.dot(h, w2_ref[...], preferred_element_type=jnp.float32) + b2_ref[...]
    h = jnp.maximum(h, 0.0).astype(jnp.bfloat16)

    h = jnp.dot(h, w3_ref[...], preferred_element_type=jnp.float32) + b3_ref[...]
    h = jnp.maximum(h, 0.0).astype(jnp.bfloat16)

    out = jnp.dot(h, w4_ref[...], preferred_element_type=jnp.float32) + b4_ref[...]
    o_ref[...] = out.astype(o_ref.dtype)


@functools.partial(jax.jit, static_argnames=("block_b",))
def qnetwork_forward(x, params, *, block_b: int = 512):
    """x: (B, obs_dims) float32.  params: list of PyTorch-convention (w, b)
    with w: (out, in), b: (out,).  Returns (B, action_dims) float32."""
    (w1, b1), (w2, b2), (w3, b3), (w4, b4) = params

    B, obs_dims = x.shape
    action_dims = w4.shape[0]
    h1 = w1.shape[0]   # 64
    h2 = w2.shape[0]   # 128

    # Lane-friendly padded feature dims.
    k_pad = _round_up(obs_dims, 128)
    n_pad = _round_up(action_dims, 128)

    # Batch tile: multiple of 8 sublanes, capped at 512 rows.
    tb = min(block_b, _round_up(B, 8))
    b_pad = _round_up(B, tb)
    grid = (b_pad // tb,)

    # --- wrapper-side glue: transpose to (in, out), cast to bf16, zero-pad ---
    x_p = jnp.zeros((b_pad, k_pad), jnp.bfloat16).at[:B, :obs_dims].set(
        x.astype(jnp.bfloat16))

    w1t = jnp.zeros((k_pad, h1), jnp.bfloat16).at[:obs_dims, :].set(
        w1.T.astype(jnp.bfloat16))
    w2t = w2.T.astype(jnp.bfloat16)                       # (h1, h2)
    w3t = w3.T.astype(jnp.bfloat16)                       # (h2, h2)
    w4t = jnp.zeros((h2, n_pad), jnp.bfloat16).at[:, :action_dims].set(
        w4.T.astype(jnp.bfloat16))

    b1r = b1.astype(jnp.float32).reshape(1, h1)
    b2r = b2.astype(jnp.float32).reshape(1, h2)
    b3r = b3.astype(jnp.float32).reshape(1, h2)
    b4r = jnp.zeros((1, n_pad), jnp.float32).at[0, :action_dims].set(
        b4.astype(jnp.float32))

    # Weights/biases: full array resident in VMEM (constant block index).
    resident = lambda a: pl.BlockSpec(a.shape, lambda i: (0,) * a.ndim)

    flops = 2 * b_pad * (k_pad * h1 + h1 * h2 + h2 * h2 + h2 * n_pad)
    bytes_accessed = (
        x_p.size * 2 + b_pad * n_pad * 4                      # x in (bf16) + out (f32)
        + (w1t.size + w2t.size + w3t.size + w4t.size) * 2     # weights (bf16)
        + (b1r.size + b2r.size + b3r.size + b4r.size) * 4)    # biases (f32)

    out_padded = pl.pallas_call(
        qnetwork_kernel,
        out_shape=jax.ShapeDtypeStruct((b_pad, n_pad), jnp.float32),
        grid=grid,
        in_specs=[pl.BlockSpec((tb, k_pad), lambda i: (i, 0)),
                  resident(w1t), resident(b1r),
                  resident(w2t), resident(b2r),
                  resident(w3t), resident(b3r),
                  resident(w4t), resident(b4r)],
        out_specs=pl.BlockSpec((tb, n_pad), lambda i: (i, 0)),
        compiler_params=pltpu.CompilerParams(
            dimension_semantics=("parallel",),
            vmem_limit_bytes=32 * 1024 * 1024),
        cost_estimate=pl.CostEstimate(flops=flops,
                                      transcendentals=0,
                                      bytes_accessed=bytes_accessed),
    )(x_p, w1t, b1r, w2t, b2r, w3t, b3r, w4t, b4r)

    # Slice away the batch / lane padding outside the kernel (cheap XLA slice).
    return out_padded[:B, :action_dims]


def init_params(key, obs_space_dims, action_space_dims):
    """Deterministic synthetic init mirroring QNetwork.__init__.
    PyTorch convention: weight (out_features, in_features), bias (out_features,)."""
    h1, h2 = 64, 128
    dims = [(h1, obs_space_dims), (h2, h1), (h2, h2), (action_space_dims, h2)]
    params = []
    for (out_d, in_d) in dims:
        key, kw, kb = jax.random.split(key, 3)
        bound = 1.0 / jnp.sqrt(in_d)  # matches nn.Linear default U(-1/sqrt(in), 1/sqrt(in))
        w = jax.random.uniform(kw, (out_d, in_d), jnp.float32, -bound, bound)
        b = jax.random.uniform(kb, (out_d,), jnp.float32, -bound, bound)
        params.append((w, b))
    return params


def reference_forward_f32(x, params):
    """Plain-JAX f32 reference of the PyTorch forward."""
    h = x
    for i, (w, b) in enumerate(params):
        h = h @ w.T + b
        if i < len(params) - 1:
            h = jnp.maximum(h, 0.0)
    return h


def reference_forward_bf16(x, params):
    """Reference matching the kernel's bf16-operand / f32-accumulate arithmetic."""
    h = x.astype(jnp.bfloat16)
    for i, (w, b) in enumerate(params):
        h = jnp.dot(h, w.T.astype(jnp.bfloat16),
                    preferred_element_type=jnp.float32) + b.astype(jnp.float32)
        if i < len(params) - 1:
            h = jnp.maximum(h, 0.0).astype(jnp.bfloat16)
    return h


if __name__ == "__main__":
    key = jax.random.PRNGKey(0)
    obs_space_dims = 8       # small observation vector
    action_space_dims = 4    # small discrete action space
    batch = 2

    key, kx = jax.random.split(key)
    x = jax.random.normal(kx, (batch, obs_space_dims), dtype=jnp.float32)

    params = init_params(key, obs_space_dims, action_space_dims)

    out = qnetwork_forward(x, params)
    out = jax.block_until_ready(out)
    assert out.shape == (batch, action_space_dims)

    # Tight check vs a reference using the same bf16-operand arithmetic.
    ref_bf16 = reference_forward_bf16(x, params)
    assert jnp.allclose(out, ref_bf16, atol=2e-3, rtol=2e-3), \
        f"mismatch vs bf16-matched reference: {out} vs {ref_bf16}"

    # Loose sanity check vs the full-precision PyTorch-equivalent forward.
    ref_f32 = reference_forward_f32(x, params)
    assert jnp.allclose(out, ref_f32, atol=5e-2, rtol=5e-2), \
        f"mismatch vs f32 reference: {out} vs {ref_f32}"

    print("KERNEL_OK")
</pallas_src>

<mosaic_0001>
module attributes {stable_mosaic.version = 11 : i64} {
  func.func @qnetwork_kernel(%arg0: i32, %arg1: memref<8x128xbf16, #tpu.memory_space<vmem>>, %arg2: memref<128x64xbf16, #tpu.memory_space<vmem>>, %arg3: memref<1x64xf32, #tpu.memory_space<vmem>>, %arg4: memref<64x128xbf16, #tpu.memory_space<vmem>>, %arg5: memref<1x128xf32, #tpu.memory_space<vmem>>, %arg6: memref<128x128xbf16, #tpu.memory_space<vmem>>, %arg7: memref<1x128xf32, #tpu.memory_space<vmem>>, %arg8: memref<128x128xbf16, #tpu.memory_space<vmem>>, %arg9: memref<1x128xf32, #tpu.memory_space<vmem>>, %arg10: memref<8x128xf32, #tpu.memory_space<vmem>>) attributes {dimension_semantics = [#tpu.dimension_semantics<parallel>], iteration_bounds = array<i64: 1>, scalar_prefetch = 0 : i64, scratch_operands = 0 : i64, tpu.core_type = #tpu.core_type<tc>, window_params = [{transform_indices = @transform_0, window_bounds = array<i64: 8, 128>}, {pipeline_mode = #tpu.pipeline_mode<synchronous>, transform_indices = @transform_1, window_bounds = array<i64: 128, 64>}, {pipeline_mode = #tpu.pipeline_mode<synchronous>, transform_indices = @transform_2, window_bounds = array<i64: 1, 64>}, {pipeline_mode = #tpu.pipeline_mode<synchronous>, transform_indices = @transform_3, window_bounds = array<i64: 64, 128>}, {pipeline_mode = #tpu.pipeline_mode<synchronous>, transform_indices = @transform_4, window_bounds = array<i64: 1, 128>}, {pipeline_mode = #tpu.pipeline_mode<synchronous>, transform_indices = @transform_5, window_bounds = array<i64: 128, 128>}, {pipeline_mode = #tpu.pipeline_mode<synchronous>, transform_indices = @transform_6, window_bounds = array<i64: 1, 128>}, {pipeline_mode = #tpu.pipeline_mode<synchronous>, transform_indices = @transform_7, window_bounds = array<i64: 128, 128>}, {pipeline_mode = #tpu.pipeline_mode<synchronous>, transform_indices = @transform_8, window_bounds = array<i64: 1, 128>}, {transform_indices = @transform_9, window_bounds = array<i64: 8, 128>}]} {
    %c0 = arith.constant 0 : index
    %c0_0 = arith.constant 0 : index
    %0 = vector.load %arg1[%c0, %c0_0] : memref<8x128xbf16, #tpu.memory_space<vmem>>, vector<8x128xbf16>
    %c0_1 = arith.constant 0 : index
    %c0_2 = arith.constant 0 : index
    %1 = vector.load %arg2[%c0_1, %c0_2] : memref<128x64xbf16, #tpu.memory_space<vmem>>, vector<128x64xbf16>
    %cst = arith.constant dense<0.000000e+00> : vector<8x64xf32>
    %2 = tpu.matmul %0, %1, %cst {dimension_numbers = #tpu.dot_dimension_numbers<[1], [0], [0], [1], [0, 0, 1, 1], [], []>} : vector<8x128xbf16>, vector<128x64xbf16>, vector<8x64xf32> -> vector<8x64xf32>
    %c0_3 = arith.constant 0 : index
    %c0_4 = arith.constant 0 : index
    %3 = vector.load %arg3[%c0_3, %c0_4] : memref<1x64xf32, #tpu.memory_space<vmem>>, vector<1x64xf32>
    %4 = vector.broadcast %3 : vector<1x64xf32> to vector<8x64xf32>
    %5 = arith.addf %2, %4 : vector<8x64xf32>
    %cst_5 = arith.constant 0.000000e+00 : f32
    %6 = vector.broadcast %cst_5 : f32 to vector<8x64xf32>
    %7 = arith.maximumf %5, %6 : vector<8x64xf32>
    %8 = arith.truncf %7 : vector<8x64xf32> to vector<8x64xbf16>
    %c0_6 = arith.constant 0 : index
    %c0_7 = arith.constant 0 : index
    %9 = vector.load %arg4[%c0_6, %c0_7] : memref<64x128xbf16, #tpu.memory_space<vmem>>, vector<64x128xbf16>
    %cst_8 = arith.constant dense<0.000000e+00> : vector<8x128xf32>
    %10 = tpu.matmul %8, %9, %cst_8 {dimension_numbers = #tpu.dot_dimension_numbers<[1], [0], [0], [1], [0, 0, 1, 1], [], []>} : vector<8x64xbf16>, vector<64x128xbf16>, vector<8x128xf32> -> vector<8x128xf32>
    %c0_9 = arith.constant 0 : index
    %c0_10 = arith.constant 0 : index
    %11 = vector.load %arg5[%c0_9, %c0_10] : memref<1x128xf32, #tpu.memory_space<vmem>>, vector<1x128xf32>
    %12 = vector.broadcast %11 : vector<1x128xf32> to vector<8x128xf32>
    %13 = arith.addf %10, %12 : vector<8x128xf32>
    %cst_11 = arith.constant 0.000000e+00 : f32
    %14 = vector.broadcast %cst_11 : f32 to vector<8x128xf32>
    %15 = arith.maximumf %13, %14 : vector<8x128xf32>
    %16 = arith.truncf %15 : vector<8x128xf32> to vector<8x128xbf16>
    %c0_12 = arith.constant 0 : index
    %c0_13 = arith.constant 0 : index
    %17 = vector.load %arg6[%c0_12, %c0_13] : memref<128x128xbf16, #tpu.memory_space<vmem>>, vector<128x128xbf16>
    %cst_14 = arith.constant dense<0.000000e+00> : vector<8x128xf32>
    %18 = tpu.matmul %16, %17, %cst_14 {dimension_numbers = #tpu.dot_dimension_numbers<[1], [0], [0], [1], [0, 0, 1, 1], [], []>} : vector<8x128xbf16>, vector<128x128xbf16>, vector<8x128xf32> -> vector<8x128xf32>
    %c0_15 = arith.constant 0 : index
    %c0_16 = arith.constant 0 : index
    %19 = vector.load %arg7[%c0_15, %c0_16] : memref<1x128xf32, #tpu.memory_space<vmem>>, vector<1x128xf32>
    %20 = vector.broadcast %19 : vector<1x128xf32> to vector<8x128xf32>
    %21 = arith.addf %18, %20 : vector<8x128xf32>
    %cst_17 = arith.constant 0.000000e+00 : f32
    %22 = vector.broadcast %cst_17 : f32 to vector<8x128xf32>
    %23 = arith.maximumf %21, %22 : vector<8x128xf32>
    %24 = arith.truncf %23 : vector<8x128xf32> to vector<8x128xbf16>
    %c0_18 = arith.constant 0 : index
    %c0_19 = arith.constant 0 : index
    %25 = vector.load %arg8[%c0_18, %c0_19] : memref<128x128xbf16, #tpu.memory_space<vmem>>, vector<128x128xbf16>
    %cst_20 = arith.constant dense<0.000000e+00> : vector<8x128xf32>
    %26 = tpu.matmul %24, %25, %cst_20 {dimension_numbers = #tpu.dot_dimension_numbers<[1], [0], [0], [1], [0, 0, 1, 1], [], []>} : vector<8x128xbf16>, vector<128x128xbf16>, vector<8x128xf32> -> vector<8x128xf32>
    %c0_21 = arith.constant 0 : index
    %c0_22 = arith.constant 0 : index
    %27 = vector.load %arg9[%c0_21, %c0_22] : memref<1x128xf32, #tpu.memory_space<vmem>>, vector<1x128xf32>
    %28 = vector.broadcast %27 : vector<1x128xf32> to vector<8x128xf32>
    %29 = arith.addf %26, %28 : vector<8x128xf32>
    %c0_23 = arith.constant 0 : index
    %c0_24 = arith.constant 0 : index
    %30 = vector.load %arg10[%c0_23, %c0_24] : memref<8x128xf32, #tpu.memory_space<vmem>>, vector<8x128xf32>
    tpu.vector_store %arg10[%c0_23, %c0_24], %29 {strides = array<i32>} : memref<8x128xf32, #tpu.memory_space<vmem>>, vector<8x128xf32>,
    return
  }
  func.func @transform_0(%arg0: i32) -> (i32, i32) {
    %c0_i32 = arith.constant 0 : i32
    %c0_i32_0 = arith.constant 0 : i32
    return %arg0, %c0_i32 : i32, i32
  }
  func.func @transform_1(%arg0: i32) -> (i32, i32) {
    %c0_i32 = arith.constant 0 : i32
    %c0_i32_0 = arith.constant 0 : i32
    %c0_i32_1 = arith.constant 0 : i32
    return %c0_i32, %c0_i32_0 : i32, i32
  }
  func.func @transform_2(%arg0: i32) -> (i32, i32) {
    %c0_i32 = arith.constant 0 : i32
    %c0_i32_0 = arith.constant 0 : i32
    %c0_i32_1 = arith.constant 0 : i32
    return %c0_i32, %c0_i32_0 : i32, i32
  }
  func.func @transform_3(%arg0: i32) -> (i32, i32) {
    %c0_i32 = arith.constant 0 : i32
    %c0_i32_0 = arith.constant 0 : i32
    %c0_i32_1 = arith.constant 0 : i32
    return %c0_i32, %c0_i32_0 : i32, i32
  }
  func.func @transform_4(%arg0: i32) -> (i32, i32) {
    %c0_i32 = arith.constant 0 : i32
    %c0_i32_0 = arith.constant 0 : i32
    %c0_i32_1 = arith.constant 0 : i32
    return %c0_i32, %c0_i32_0 : i32, i32
  }
  func.func @transform_5(%arg0: i32) -> (i32, i32) {
    %c0_i32 = arith.constant 0 : i32
    %c0_i32_0 = arith.constant 0 : i32
    %c0_i32_1 = arith.constant 0 : i32
    return %c0_i32, %c0_i32_0 : i32, i32
  }
  func.func @transform_6(%arg0: i32) -> (i32, i32) {
    %c0_i32 = arith.constant 0 : i32
    %c0_i32_0 = arith.constant 0 : i32
    %c0_i32_1 = arith.constant 0 : i32
    return %c0_i32, %c0_i32_0 : i32, i32
  }
  func.func @transform_7(%arg0: i32) -> (i32, i32) {
    %c0_i32 = arith.constant 0 : i32
    %c0_i32_0 = arith.constant 0 : i32
    %c0_i32_1 = arith.constant 0 : i32
    return %c0_i32, %c0_i32_0 : i32, i32
  }
  func.func @transform_8(%arg0: i32) -> (i32, i32) {
    %c0_i32 = arith.constant 0 : i32
    %c0_i32_0 = arith.constant 0 : i32
    %c0_i32_1 = arith.constant 0 : i32
    return %c0_i32, %c0_i32_0 : i32, i32
  }
  func.func @transform_9(%arg0: i32) -> (i32, i32) {
    %c0_i32 = arith.constant 0 : i32
    %c0_i32_0 = arith.constant 0 : i32
    return %arg0, %c0_i32 : i32, i32
  }
}

</mosaic_0001>

<llo_original>
// kernel: qnetwork_forward.1
$region0: #{qnetwork_forward.1}
  #allocation0 [shape = 'u32[]', space=smem, size = 0x4, offset = 0x4, fixed_abs, tag = 'smem constant byte address 0x4 - core index']
  #allocation1 [shape = 'u32[144,128]{1,0:T(1,128)}', space=vmem, size = 0x12000, scoped, tag = 'internal scratch']
  %s0 = inlined_call_operand.vmem [shape: bf16[8,128], index: 0, kind: input, shape index: {}]
  %s1 = inlined_call_operand.vmem [shape: bf16[128,64], index: 1, kind: input, shape index: {}]
  %s2 = inlined_call_operand.vmem [shape: f32[1,64], index: 2, kind: input, shape index: {}]
  %s3 = inlined_call_operand.vmem [shape: bf16[64,128], index: 3, kind: input, shape index: {}]
  %s4 = inlined_call_operand.vmem [shape: f32[1,128], index: 4, kind: input, shape index: {}]
  %s5 = inlined_call_operand.vmem [shape: bf16[128,128], index: 5, kind: input, shape index: {}]
  %s6 = inlined_call_operand.vmem [shape: f32[1,128], index: 6, kind: input, shape index: {}]
  %s7 = inlined_call_operand.vmem [shape: bf16[128,128], index: 7, kind: input, shape index: {}]
  %s8 = inlined_call_operand.vmem [shape: f32[1,128], index: 8, kind: input, shape index: {}]
  %s9 = inlined_call_operand.vmem [shape: f32[8,128], index: 9, kind: output, shape index: {}]
  %s10 = sld [smem:[#allocation0]]
  $region46: #{qnetwork_forward.1} parent=0
    _
  %s12 = ssub.s32 1, %s10
  %s13 = scalar_select 0, %s12, %s10
  // Predicated region
  $region2: #{qnetwork_forward.1} parent=0 // pred_check
    _
  $region3: #{qnetwork_forward.1} parent=0 // pred_check_branch
    %15 = sbr.rel (0) target = $region5
  $region4: #{qnetwork_forward.1} parent=0 // pred_region
    _
  $region5: #{qnetwork_forward.1} parent=0 // pred_fallthru
    _
  // Predicated region
  $region6: #{qnetwork_forward.1} parent=0 // pred_check
    _
  $region7: #{qnetwork_forward.1} parent=0 // pred_check_branch
    %17 = sbr.rel (0) target = $region9
  $region8: #{qnetwork_forward.1} parent=0 // pred_region
    _
  $region9: #{qnetwork_forward.1} parent=0 // pred_fallthru
    _
  // Predicated region
  $region10: #{qnetwork_forward.1} parent=0 // pred_check
    _
  $region11: #{qnetwork_forward.1} parent=0 // pred_check_branch
    %19 = sbr.rel (0) target = $region13
  $region12: #{qnetwork_forward.1} parent=0 // pred_region
    _
  $region13: #{qnetwork_forward.1} parent=0 // pred_fallthru
    _
  // Predicated region
  $region14: #{qnetwork_forward.1} parent=0 // pred_check
    _
  $region15: #{qnetwork_forward.1} parent=0 // pred_check_branch
    %21 = sbr.rel (0) target = $region17
  $region16: #{qnetwork_forward.1} parent=0 // pred_region
    _
  $region17: #{qnetwork_forward.1} parent=0 // pred_fallthru
    _
  // Predicated region
  $region18: #{qnetwork_forward.1} parent=0 // pred_check
    _
  $region19: #{qnetwork_forward.1} parent=0 // pred_check_branch
    %23 = sbr.rel (0) target = $region21
  $region20: #{qnetwork_forward.1} parent=0 // pred_region
    _
  $region21: #{qnetwork_forward.1} parent=0 // pred_fallthru
    _
  // Predicated region
  $region22: #{qnetwork_forward.1} parent=0 // pred_check
    _
  $region23: #{qnetwork_forward.1} parent=0 // pred_check_branch
    %25 = sbr.rel (0) target = $region25
  $region24: #{qnetwork_forward.1} parent=0 // pred_region
    _
  $region25: #{qnetwork_forward.1} parent=0 // pred_fallthru
    _
  // Predicated region
  $region26: #{qnetwork_forward.1} parent=0 // pred_check
    _
  $region27: #{qnetwork_forward.1} parent=0 // pred_check_branch
    %27 = sbr.rel (0) target = $region29
  $region28: #{qnetwork_forward.1} parent=0 // pred_region
    _
  $region29: #{qnetwork_forward.1} parent=0 // pred_fallthru
    _
  // Predicated region
  $region30: #{qnetwork_forward.1} parent=0 // pred_check
    _
  $region31: #{qnetwork_forward.1} parent=0 // pred_check_branch
    %29 = sbr.rel (0) target = $region33
  $region32: #{qnetwork_forward.1} parent=0 // pred_region
    _
  $region33: #{qnetwork_forward.1} parent=0 // pred_fallthru
    _
  // Predicated region
  $region34: #{qnetwork_forward.1} parent=0 // pred_check
    _
  $region35: #{qnetwork_forward.1} parent=0 // pred_check_branch
    %31 = sbr.rel (0) target = $region37
  $region36: #{qnetwork_forward.1} parent=0 // pred_region
    _
  $region37: #{qnetwork_forward.1} parent=0 // pred_fallthru
    _
  %v33 = vld [vmem:[%s0] sm:$0xf]
  %v34 = vld [vmem:[%s1] sm:$0xf]
  %v35 = vld [vmem:[%s1 + $0x4] sm:$0xf]
  %v36 = vld [vmem:[%s1 + $0x8] sm:$0xf]
  %v37 = vld [vmem:[%s1 + $0xc] sm:$0xf]
  %v38 = vld [vmem:[%s1 + $0x10] sm:$0xf]
  %v39 = vld [vmem:[%s1 + $0x14] sm:$0xf]
  %v40 = vld [vmem:[%s1 + $0x18] sm:$0xf]
  %v41 = vld [vmem:[%s1 + $0x1c] sm:$0xf]
  %v42 = vld [vmem:[%s1 + $0x20] sm:$0xf]
  %v43 = vld [vmem:[%s1 + $0x24] sm:$0xf]
  %v44 = vld [vmem:[%s1 + $0x28] sm:$0xf]
  %v45 = vld [vmem:[%s1 + $0x2c] sm:$0xf]
  %v46 = vld [vmem:[%s1 + $0x30] sm:$0xf]
  %v47 = vld [vmem:[%s1 + $0x34] sm:$0xf]
  %v48 = vld [vmem:[%s1 + $0x38] sm:$0xf]
  %v49 = vld [vmem:[%s1 + $0x3c] sm:$0xf]
  %v50 = vld [vmem:[%s2] sm:$0x1]
  %v52 = vlaneseq
  %v53 = vshrl.u32 %v52, 7
  %v54 = vsub.s32 0, %v53
  %v55 = vrot.slane %v50, %v54
  %v73 = vunpack.c.l.b16 %v34
  %v74 = vunpack.c.l.b16 %v35
  %v75 = vunpack.c.l.b16 %v36
  %v76 = vunpack.c.l.b16 %v37
  %v77 = vunpack.c.l.b16 %v38
  %v78 = vunpack.c.l.b16 %v39
  %v79 = vunpack.c.l.b16 %v40
  %v80 = vunpack.c.l.b16 %v41
  %v81 = vunpack.c.l.b16 %v42
  %v82 = vunpack.c.l.b16 %v43
  %v83 = vunpack.c.l.b16 %v44
  %v84 = vunpack.c.l.b16 %v45
  %v85 = vunpack.c.l.b16 %v46
  %v86 = vunpack.c.l.b16 %v47
  %v87 = vunpack.c.l.b16 %v48
  %v88 = vunpack.c.l.b16 %v49
  %v89 = vpack.c.b16 %v74, %v73
  %v90 = vpack.c.b16 %v76, %v75
  %v91 = vpack.c.b16 %v78, %v77
  %v92 = vpack.c.b16 %v80, %v79
  %v93 = vpack.c.b16 %v82, %v81
  %v94 = vpack.c.b16 %v84, %v83
  %v95 = vpack.c.b16 %v86, %v85
  %v96 = vpack.c.b16 %v88, %v87
  %105 = vmatprep.subr.bf16.mxu0 0
  %106 = vmatpush1.bf16.msra.mxu0 %v89
  %107 = vmatprep.subr.bf16.mxu0 0
  %108 = vmatpush1.bf16.msra.mxu0 %v90
  %109 = vmatprep.subr.bf16.mxu0 0
  %110 = vmatpush1.bf16.msra.mxu0 %v91
  %111 = vmatprep.subr.bf16.mxu0 0
  %112 = vmatpush1.bf16.msra.mxu0 %v92
  %113 = vmatprep.subr.bf16.mxu0 0
  %114 = vmatpush1.bf16.msra.mxu0 %v93
  %115 = vmatprep.subr.bf16.mxu0 0
  %116 = vmatpush1.bf16.msra.mxu0 %v94
  %117 = vmatprep.subr.bf16.mxu0 0
  %118 = vmatpush1.bf16.msra.mxu0 %v95
  %119 = vmatprep.subr.bf16.mxu0 0
  %120 = vmatpush1.bf16.msra.mxu0 %v96
  %121 = vmatprep.subr.bf16.mxu0 0
  %122 = vmatpush1.bf16.msra.mxu0 0
  %123 = vmatprep.subr.bf16.mxu0 0
  %124 = vmatpush1.bf16.msra.mxu0 0
  %125 = vmatprep.subr.bf16.mxu0 0
  %126 = vmatpush1.bf16.msra.mxu0 0
  %127 = vmatprep.subr.bf16.mxu0 0
  %128 = vmatpush1.bf16.msra.mxu0 0
  %129 = vmatprep.subr.bf16.mxu0 0
  %130 = vmatpush1.bf16.msra.mxu0 0
  %131 = vmatprep.subr.bf16.mxu0 0
  %132 = vmatpush1.bf16.msra.mxu0 0
  %133 = vmatprep.subr.bf16.mxu0 0
  %134 = vmatpush1.bf16.msra.mxu0 0
  %135 = vmatprep.subr.bf16.mxu0 0
  %136 = vmatpush1.bf16.msra.mxu0 0
  %137 = vmatprep.mubr.bf16.mxu0 0
  %138 = vmatmul.mubr.bf16.gmra.mrb[0].mxu0 %v33
  %v139 = vpop.f32.mrb[0].mxu0
  %v140 = vadd.f32 %v55, %v139
  %v141 = vpop.f32.mrb[0].mxu0
  %v142 = vpop.f32.mrb[0].mxu0
  %v143 = vpop.f32.mrb[0].mxu0
  %144 = vdwg.mxu0
  %v145 = vmax.f32 %v140, 0.0
  %v146 = vpack.c.bf16 %v145, %v145
  %v147 = vld [vmem:[%s3] sm:$0xf]
  %v148 = vld [vmem:[%s3 + $0x4] sm:$0xf]
  %v149 = vld [vmem:[%s3 + $0x8] sm:$0xf]
  %v150 = vld [vmem:[%s3 + $0xc] sm:$0xf]
  %v151 = vld [vmem:[%s3 + $0x10] sm:$0xf]
  %v152 = vld [vmem:[%s3 + $0x14] sm:$0xf]
  %v153 = vld [vmem:[%s3 + $0x18] sm:$0xf]
  %v154 = vld [vmem:[%s3 + $0x1c] sm:$0xf]
  %v155 = vld [vmem:[%s4] sm:$0x1]
  %v157 = vlaneseq
  %v158 = vshrl.u32 %v157, 7
  %v159 = vsub.s32 0, %v158
  %v160 = vrot.slane %v155, %v159
  %v170 = vunpack.c.l.b16 %v147
  %v171 = vunpack.c.l.b16 %v148
  %v172 = vunpack.c.l.b16 %v149
  %v173 = vunpack.c.l.b16 %v150
  %v174 = vunpack.c.l.b16 %v151
  %v175 = vunpack.c.l.b16 %v152
  %v176 = vunpack.c.l.b16 %v153
  %v177 = vunpack.c.l.b16 %v154
  %v178 = vpack.c.b16 %v171, %v170
  %v179 = vpack.c.b16 %v173, %v172
  %v180 = vpack.c.b16 %v175, %v174
  %v181 = vpack.c.b16 %v177, %v176
  %vm186 = vcmask 523264
  %v188 = vsel %vm186, %v146, 0
  %190 = vmatprep.subr.bf16.mxu0 0
  %191 = vmatpush1.bf16.msra.mxu0 %v178
  %192 = vmatprep.subr.bf16.mxu0 0
  %193 = vmatpush1.bf16.msra.mxu0 %v179
  %194 = vmatprep.subr.bf16.mxu0 0
  %195 = vmatpush1.bf16.msra.mxu0 %v180
  %196 = vmatprep.subr.bf16.mxu0 0
  %197 = vmatpush1.bf16.msra.mxu0 %v181
  %198 = vmatprep.subr.bf16.mxu0 0
  %199 = vmatpush1.bf16.msra.mxu0 0
  %200 = vmatprep.subr.bf16.mxu0 0
  %201 = vmatpush1.bf16.msra.mxu0 0
  %202 = vmatprep.subr.bf16.mxu0 0
  %203 = vmatpush1.bf16.msra.mxu0 0
  %204 = vmatprep.subr.bf16.mxu0 0
  %205 = vmatpush1.bf16.msra.mxu0 0
  %206 = vmatprep.subr.bf16.mxu0 0
  %207 = vmatpush1.bf16.msra.mxu0 0
  %208 = vmatprep.subr.bf16.mxu0 0
  %209 = vmatpush1.bf16.msra.mxu0 0
  %210 = vmatprep.subr.bf16.mxu0 0
  %211 = vmatpush1.bf16.msra.mxu0 0
  %212 = vmatprep.subr.bf16.mxu0 0
  %213 = vmatpush1.bf16.msra.mxu0 0
  %214 = vmatprep.subr.bf16.mxu0 0
  %215 = vmatpush1.bf16.msra.mxu0 0
  %216 = vmatprep.subr.bf16.mxu0 0
  %217 = vmatpush1.bf16.msra.mxu0 0
  %218 = vmatprep.subr.bf16.mxu0 0
  %219 = vmatpush1.bf16.msra.mxu0 0
  %220 = vmatprep.subr.bf16.mxu0 0
  %221 = vmatpush1.bf16.msra.mxu0 0
  %222 = vmatprep.mubr.bf16.mxu0 0
  %223 = vmatmul.mubr.bf16.gmra.mrb[0].mxu0 %v188
  %v224 = vpop.f32.mrb[0].mxu0
  %v225 = vadd.f32 %v160, %v224
  %v226 = vpop.f32.mrb[0].mxu0
  %v227 = vpop.f32.mrb[0].mxu0
  %v228 = vpop.f32.mrb[0].mxu0
  %229 = vdwg.mxu0
  %v230 = vmax.f32 %v225, 0.0
  %v231 = vpack.c.bf16 %v230, %v230
  %v232 = vld [vmem:[%s5] sm:$0xf]
  %v233 = vld [vmem:[%s5 + $0x4] sm:$0xf]
  %v234 = vld [vmem:[%s5 + $0x8] sm:$0xf]
  %v235 = vld [vmem:[%s5 + $0xc] sm:$0xf]
  %v236 = vld [vmem:[%s5 + $0x10] sm:$0xf]
  %v237 = vld [vmem:[%s5 + $0x14] sm:$0xf]
  %v238 = vld [vmem:[%s5 + $0x18] sm:$0xf]
  %v239 = vld [vmem:[%s5 + $0x1c] sm:$0xf]
  %v240 = vld [vmem:[%s5 + $0x20] sm:$0xf]
  %v241 = vld [vmem:[%s5 + $0x24] sm:$0xf]
  %v242 = vld [vmem:[%s5 + $0x28] sm:$0xf]
  %v243 = vld [vmem:[%s5 + $0x2c] sm:$0xf]
  %v244 = vld [vmem:[%s5 + $0x30] sm:$0xf]
  %v245 = vld [vmem:[%s5 + $0x34] sm:$0xf]
  %v246 = vld [vmem:[%s5 + $0x38] sm:$0xf]
  %v247 = vld [vmem:[%s5 + $0x3c] sm:$0xf]
  %v248 = vld [vmem:[%s6] sm:$0x1]
  %v250 = vlaneseq
  %v251 = vshrl.u32 %v250, 7
  %v252 = vsub.s32 0, %v251
  %v253 = vrot.slane %v248, %v252
  %v271 = vunpack.c.l.b16 %v232
  %v272 = vunpack.c.l.b16 %v233
  %v273 = vunpack.c.l.b16 %v234
  %v274 = vunpack.c.l.b16 %v235
  %v275 = vunpack.c.l.b16 %v236
  %v276 = vunpack.c.l.b16 %v237
  %v277 = vunpack.c.l.b16 %v238
  %v278 = vunpack.c.l.b16 %v239
  %v279 = vunpack.c.l.b16 %v240
  %v280 = vunpack.c.l.b16 %v241
  %v281 = vunpack.c.l.b16 %v242
  %v282 = vunpack.c.l.b16 %v243
  %v283 = vunpack.c.l.b16 %v244
  %v284 = vunpack.c.l.b16 %v245
  %v285 = vunpack.c.l.b16 %v246
  %v286 = vunpack.c.l.b16 %v247
  %v287 = vpack.c.b16 %v272, %v271
  %v288 = vpack.c.b16 %v274, %v273
  %v289 = vpack.c.b16 %v276, %v275
  %v290 = vpack.c.b16 %v278, %v277
  %v291 = vpack.c.b16 %v280, %v279
  %v292 = vpack.c.b16 %v282, %v281
  %v293 = vpack.c.b16 %v284, %v283
  %v294 = vpack.c.b16 %v286, %v285
  %303 = vmatprep.subr.bf16.mxu0 0
  %304 = vmatpush1.bf16.msra.mxu0 %v287
  %305 = vmatprep.subr.bf16.mxu0 0
  %306 = vmatpush1.bf16.msra.mxu0 %v288
  %307 = vmatprep.subr.bf16.mxu0 0
  %308 = vmatpush1.bf16.msra.mxu0 %v289
  %309 = vmatprep.subr.bf16.mxu0 0
  %310 = vmatpush1.bf16.msra.mxu0 %v290
  %311 = vmatprep.subr.bf16.mxu0 0
  %312 = vmatpush1.bf16.msra.mxu0 %v291
  %313 = vmatprep.subr.bf16.mxu0 0
  %314 = vmatpush1.bf16.msra.mxu0 %v292
  %315 = vmatprep.subr.bf16.mxu0 0
  %316 = vmatpush1.bf16.msra.mxu0 %v293
  %317 = vmatprep.subr.bf16.mxu0 0
  %318 = vmatpush1.bf16.msra.mxu0 %v294
  %319 = vmatprep.subr.bf16.mxu0 0
  %320 = vmatpush1.bf16.msra.mxu0 0
  %321 = vmatprep.subr.bf16.mxu0 0
  %322 = vmatpush1.bf16.msra.mxu0 0
  %323 = vmatprep.subr.bf16.mxu0 0
  %324 = vmatpush1.bf16.msra.mxu0 0
  %325 = vmatprep.subr.bf16.mxu0 0
  %326 = vmatpush1.bf16.msra.mxu0 0
  %327 = vmatprep.subr.bf16.mxu0 0
  %328 = vmatpush1.bf16.msra.mxu0 0
  %329 = vmatprep.subr.bf16.mxu0 0
  %330 = vmatpush1.bf16.msra.mxu0 0
  %331 = vmatprep.subr.bf16.mxu0 0
  %332 = vmatpush1.bf16.msra.mxu0 0
  %333 = vmatprep.subr.bf16.mxu0 0
  %334 = vmatpush1.bf16.msra.mxu0 0
  %335 = vmatprep.mubr.bf16.mxu0 0
  %336 = vmatmul.mubr.bf16.gmra.mrb[0].mxu0 %v231
  %v337 = vpop.f32.mrb[0].mxu0
  %v338 = vadd.f32 %v253, %v337
  %v339 = vpop.f32.mrb[0].mxu0
  %v340 = vpop.f32.mrb[0].mxu0
  %v341 = vpop.f32.mrb[0].mxu0
  %342 = vdwg.mxu0
  %v343 = vmax.f32 %v338, 0.0
  %v344 = vpack.c.bf16 %v343, %v343
  %v345 = vld [vmem:[%s7] sm:$0xf]
  %v346 = vld [vmem:[%s7 + $0x4] sm:$0xf]
  %v347 = vld [vmem:[%s7 + $0x8] sm:$0xf]
  %v348 = vld [vmem:[%s7 + $0xc] sm:$0xf]
  %v349 = vld [vmem:[%s7 + $0x10] sm:$0xf]
  %v350 = vld [vmem:[%s7 + $0x14] sm:$0xf]
  %v351 = vld [vmem:[%s7 + $0x18] sm:$0xf]
  %v352 = vld [vmem:[%s7 + $0x1c] sm:$0xf]
  %v353 = vld [vmem:[%s7 + $0x20] sm:$0xf]
  %v354 = vld [vmem:[%s7 + $0x24] sm:$0xf]
  %v355 = vld [vmem:[%s7 + $0x28] sm:$0xf]
  %v356 = vld [vmem:[%s7 + $0x2c] sm:$0xf]
  %v357 = vld [vmem:[%s7 + $0x30] sm:$0xf]
  %v358 = vld [vmem:[%s7 + $0x34] sm:$0xf]
  %v359 = vld [vmem:[%s7 + $0x38] sm:$0xf]
  %v360 = vld [vmem:[%s7 + $0x3c] sm:$0xf]
  %v361 = vld [vmem:[%s8] sm:$0x1]
  %v363 = vlaneseq
  %v364 = vshrl.u32 %v363, 7
  %v365 = vsub.s32 0, %v364
  %v366 = vrot.slane %v361, %v365
  %v384 = vunpack.c.l.b16 %v345
  %v385 = vunpack.c.l.b16 %v346
  %v386 = vunpack.c.l.b16 %v347
  %v387 = vunpack.c.l.b16 %v348
  %v388 = vunpack.c.l.b16 %v349
  %v389 = vunpack.c.l.b16 %v350
  %v390 = vunpack.c.l.b16 %v351
  %v391 = vunpack.c.l.b16 %v352
  %v392 = vunpack.c.l.b16 %v353
  %v393 = vunpack.c.l.b16 %v354
  %v394 = vunpack.c.l.b16 %v355
  %v395 = vunpack.c.l.b16 %v356
  %v396 = vunpack.c.l.b16 %v357
  %v397 = vunpack.c.l.b16 %v358
  %v398 = vunpack.c.l.b16 %v359
  %v399 = vunpack.c.l.b16 %v360
  %v400 = vpack.c.b16 %v385, %v384
  %v401 = vpack.c.b16 %v387, %v386
  %v402 = vpack.c.b16 %v389, %v388
  %v403 = vpack.c.b16 %v391, %v390
  %v404 = vpack.c.b16 %v393, %v392
  %v405 = vpack.c.b16 %v395, %v394
  %v406 = vpack.c.b16 %v397, %v396
  %v407 = vpack.c.b16 %v399, %v398
  %416 = vmatprep.subr.bf16.mxu0 0
  %417 = vmatpush1.bf16.msra.mxu0 %v400
  %418 = vmatprep.subr.bf16.mxu0 0
  %419 = vmatpush1.bf16.msra.mxu0 %v401
  %420 = vmatprep.subr.bf16.mxu0 0
  %421 = vmatpush1.bf16.msra.mxu0 %v402
  %422 = vmatprep.subr.bf16.mxu0 0
  %423 = vmatpush1.bf16.msra.mxu0 %v403
  %424 = vmatprep.subr.bf16.mxu0 0
  %425 = vmatpush1.bf16.msra.mxu0 %v404
  %426 = vmatprep.subr.bf16.mxu0 0
  %427 = vmatpush1.bf16.msra.mxu0 %v405
  %428 = vmatprep.subr.bf16.mxu0 0
  %429 = vmatpush1.bf16.msra.mxu0 %v406
  %430 = vmatprep.subr.bf16.mxu0 0
  %431 = vmatpush1.bf16.msra.mxu0 %v407
  %432 = vmatprep.subr.bf16.mxu0 0
  %433 = vmatpush1.bf16.msra.mxu0 0
  %434 = vmatprep.subr.bf16.mxu0 0
  %435 = vmatpush1.bf16.msra.mxu0 0
  %436 = vmatprep.subr.bf16.mxu0 0
  %437 = vmatpush1.bf16.msra.mxu0 0
  %438 = vmatprep.subr.bf16.mxu0 0
  %439 = vmatpush1.bf16.msra.mxu0 0
  %440 = vmatprep.subr.bf16.mxu0 0
  %441 = vmatpush1.bf16.msra.mxu0 0
  %442 = vmatprep.subr.bf16.mxu0 0
  %443 = vmatpush1.bf16.msra.mxu0 0
  %444 = vmatprep.subr.bf16.mxu0 0
  %445 = vmatpush1.bf16.msra.mxu0 0
  %446 = vmatprep.subr.bf16.mxu0 0
  %447 = vmatpush1.bf16.msra.mxu0 0
  %448 = vmatprep.mubr.bf16.mxu0 0
  %449 = vmatmul.mubr.bf16.gmra.mrb[0].mxu0 %v344
  %v450 = vpop.f32.mrb[0].mxu0
  %v451 = vadd.f32 %v366, %v450
  %v452 = vpop.f32.mrb[0].mxu0
  %v453 = vpop.f32.mrb[0].mxu0
  %v454 = vpop.f32.mrb[0].mxu0
  %455 = vdwg.mxu0
  %456 = vst [vmem:[%s9] sm:$0xff] %v451
  // Predicated region
  $region38: #{qnetwork_forward.1} parent=0 // pred_check
    _
  $region39: #{qnetwork_forward.1} parent=0 // pred_check_branch
    %458 = sbr.rel (0) target = $region41
  $region40: #{qnetwork_forward.1} parent=0 // pred_region
    _
  $region41: #{qnetwork_forward.1} parent=0 // pred_fallthru
    _
  // Predicated region
  $region42: #{qnetwork_forward.1} parent=0 // pred_check
    _
  $region43: #{qnetwork_forward.1} parent=0 // pred_check_branch
    %460 = sbr.rel (0) target = $region45
  $region44: #{qnetwork_forward.1} parent=0 // pred_region
    _
  $region45: #{qnetwork_forward.1} parent=0 // pred_fallthru
    _

</llo_original>
